<compile_context>
chip_gen: v6e
topology: v6e:2x2x1
jax: 0.10.0
libtpu: 0.0.40
codegen_flags: <defaults>
</compile_context>

<pallas_src>
import jax
import jax.numpy as jnp
from jax import lax
from jax.experimental import pallas as pl
from jax.experimental.pallas import tpu as pltpu

BN_EPS = 1e-5


# ------------------------------ Pallas kernels ------------------------------ #

def conv_stats_kernel(w_ref, p_ref, y_ref, s_ref, ss_ref):
    """Pass 1 (stored-y path): conv-as-matmul + per-tile channel stats.

    w_ref:  (Cout, K)     bf16 reshaped conv weight (same block every step)
    p_ref:  (K, TM)       bf16 im2col patch tile (M on lanes)
    y_ref:  (Cout, TM)    bf16 conv output tile
    s_ref:  (1, Cout, 1)  f32 per-tile sum over M
    ss_ref: (1, Cout, 1)  f32 per-tile sum of y*y
    """
    y = jnp.dot(w_ref[...], p_ref[...], preferred_element_type=jnp.float32)
    y_ref[...] = y.astype(y_ref.dtype)
    s_ref[0] = jnp.sum(y, axis=-1, keepdims=True)
    ss_ref[0] = jnp.sum(y * y, axis=-1, keepdims=True)


def stats_only_kernel(w_ref, p_ref, s_ref, ss_ref):
    """Pass 1 (recompute path): per-tile channel stats only (y never hits HBM)."""
    y = jnp.dot(w_ref[...], p_ref[...], preferred_element_type=jnp.float32)
    s_ref[0] = jnp.sum(y, axis=-1, keepdims=True)
    ss_ref[0] = jnp.sum(y * y, axis=-1, keepdims=True)


def bn_apply_kernel(y_ref, scale_ref, shift_ref, o_ref):
    """Pass 2 (stored-y path): o = y*scale + shift, written straight into the
    (1, Cout, T_HW) block of the (N, Cout, HWp) output (no wrapper transpose)."""
    o_ref[0] = (y_ref[...].astype(jnp.float32) * scale_ref[...]
                + shift_ref[...]).astype(o_ref.dtype)


def conv_bn_fused_kernel(w_ref, p_ref, scale_ref, shift_ref, o_ref):
    """Pass 2 (recompute path): re-run the cheap matmul and apply BN in one go."""
    y = jnp.dot(w_ref[...], p_ref[...], preferred_element_type=jnp.float32)
    o_ref[0] = (y * scale_ref[...] + shift_ref[...]).astype(o_ref.dtype)


# ------------------------------ host-side glue ------------------------------ #

def _out_dim(size, k, stride, padding, dilation):
    return (size + 2 * padding - dilation * (k - 1) - 1) // stride + 1


def im2col_T(x, kh, kw, stride, padding, dilation, hw_pad, compute_dtype):
    """x: (N, C, H, W) -> patches (K, N*hw_pad) in compute_dtype, K = C*kh*kw.

    K ordering is c*(kh*kw) + i*kw + j, matching weight.reshape(Cout, Cin*kh*kw).
    The flat M axis is n*hw_pad + (oh*OW + ow); each image's HW is zero-padded to
    hw_pad (zeros contribute 0 to the BN sums; we divide by the true count).
    """
    N, C, H, W = x.shape
    x = x.astype(compute_dtype)            # build the KH*KW blow-up in bf16, not f32
    xp = jnp.pad(x, ((0, 0), (0, 0), (padding, padding), (padding, padding)))
    OH = _out_dim(H, kh, stride, padding, dilation)
    OW = _out_dim(W, kw, stride, padding, dilation)
    cols = []
    for i in range(kh):
        for j in range(kw):
            r0, c0 = i * dilation, j * dilation
            cols.append(xp[:, :,
                           r0:r0 + stride * (OH - 1) + 1:stride,
                           c0:c0 + stride * (OW - 1) + 1:stride])   # (N, C, OH, OW)
    p = jnp.stack(cols, axis=2)                         # (N, C, kh*kw, OH, OW)
    p = p.transpose(1, 2, 0, 3, 4).reshape(C * kh * kw, N, OH * OW)
    if hw_pad != OH * OW:
        p = jnp.pad(p, ((0, 0), (0, 0), (0, hw_pad - OH * OW)))
    return p.reshape(C * kh * kw, N * hw_pad)


def basic_conv2d(x, weight, gamma, beta, *, stride=1, padding=0, dilation=1,
                 block_m=512, compute_dtype=jnp.bfloat16,
                 recompute=None, vmem_limit_bytes=None):
    """Forward pass of BasicConv2d (train-mode BN statistics, no ReLU in forward).

    x:      (N, Cin, H, W) float32
    weight: (Cout, Cin, KH, KW)
    gamma, beta: (Cout,) BatchNorm2d affine parameters
    returns (N, Cout, OH, OW) float32
    """
    N, Cin, H, W = x.shape
    Cout, _, KH, KW = weight.shape
    K = Cin * KH * KW
    OH = _out_dim(H, KH, stride, padding, dilation)
    OW = _out_dim(W, KW, stride, padding, dilation)
    HW = OH * OW
    M_true = N * HW

    assert block_m % 128 == 0, "M tile must be a multiple of the 128-lane width"
    # Lane-dense tile along HW, never larger than one image's (128-rounded) HW.
    t_m = min(block_m, -(-HW // 128) * 128)
    hw_pad = -(-HW // t_m) * t_m            # per-image padded HW, multiple of t_m
    hw_tiles = hw_pad // t_m                # tiles per image
    Mp = N * hw_pad
    m_tiles = N * hw_tiles

    patches = im2col_T(x, KH, KW, stride, padding, dilation, hw_pad, compute_dtype)
    w2d = weight.reshape(Cout, K).astype(compute_dtype)    # (Cout, K), no .T needed

    if recompute is None:
        # 1x1-ish convs: re-running the matmul in pass 2 beats the y HBM round trip.
        recompute = K <= 4 * Cout

    compiler1 = pltpu.CompilerParams(
        dimension_semantics=("parallel",), vmem_limit_bytes=vmem_limit_bytes)
    compiler2 = pltpu.CompilerParams(
        dimension_semantics=("parallel", "parallel"),
        vmem_limit_bytes=vmem_limit_bytes)

    stats_shape = jax.ShapeDtypeStruct((m_tiles, Cout, 1), jnp.float32)
    stats_spec = pl.BlockSpec((1, Cout, 1), lambda i: (i, 0, 0))
    w_spec1 = pl.BlockSpec((Cout, K), lambda i: (0, 0))
    p_spec1 = pl.BlockSpec((K, t_m), lambda i: (0, i))

    # ---------------- pass 1: matmul (+ optional y store) + per-tile stats -------
    if recompute:
        psum, psumsq = pl.pallas_call(
            stats_only_kernel,
            out_shape=(stats_shape, stats_shape),
            grid=(m_tiles,),
            in_specs=[w_spec1, p_spec1],
            out_specs=(stats_spec, stats_spec),
            compiler_params=compiler1,
            cost_estimate=pl.CostEstimate(
                flops=2 * Cout * K * Mp, transcendentals=0,
                bytes_accessed=2 * K * Mp + 2 * Cout * K + 8 * m_tiles * Cout),
        )(w2d, patches)
        y_flat = None
    else:
        y_flat, psum, psumsq = pl.pallas_call(
            conv_stats_kernel,
            out_shape=(jax.ShapeDtypeStruct((Cout, Mp), compute_dtype),  # bf16 y
                       stats_shape, stats_shape),
            grid=(m_tiles,),
            in_specs=[w_spec1, p_spec1],
            out_specs=(pl.BlockSpec((Cout, t_m), lambda i: (0, i)),
                       stats_spec, stats_spec),
            compiler_params=compiler1,
            cost_estimate=pl.CostEstimate(
                flops=2 * Cout * K * Mp, transcendentals=0,
                bytes_accessed=(2 * K * Mp + 2 * Cout * K + 2 * Cout * Mp
                                + 8 * m_tiles * Cout)),
        )(w2d, patches)

    # Fold train-mode (biased-variance) BN into per-channel scale/shift.  Padded-M
    # columns contributed exactly 0 to both sums; divide by the true element count.
    # TODO(synk): E[y^2]-E[y]^2 in f32 can cancel for strongly-biased conv outputs;
    # switch to shifted/Welford-style partials if real layers show drift.
    ysum = jnp.sum(psum[:, :, 0], axis=0)
    ysumsq = jnp.sum(psumsq[:, :, 0], axis=0)
    mean = ysum / M_true
    var = jnp.maximum(ysumsq / M_true - mean * mean, 0.0)
    inv_std = lax.rsqrt(var + BN_EPS)
    g32 = gamma.astype(jnp.float32)
    scale = (g32 * inv_std).reshape(Cout, 1)
    shift = (beta.astype(jnp.float32) - mean * g32 * inv_std).reshape(Cout, 1)

    # ---------------- pass 2: apply BN, writing the NCHW(-flat) layout directly ---
    out_shape = jax.ShapeDtypeStruct((N, Cout, hw_pad), jnp.float32)
    out_spec = pl.BlockSpec((1, Cout, t_m), lambda n, j: (n, 0, j))
    sc_spec = pl.BlockSpec((Cout, 1), lambda n, j: (0, 0))

    if recompute:
        out3 = pl.pallas_call(
            conv_bn_fused_kernel,
            out_shape=out_shape,
            grid=(N, hw_tiles),
            in_specs=[pl.BlockSpec((Cout, K), lambda n, j: (0, 0)),
                      pl.BlockSpec((K, t_m), lambda n, j: (0, n * hw_tiles + j)),
                      sc_spec, sc_spec],
            out_specs=out_spec,
            compiler_params=compiler2,
            cost_estimate=pl.CostEstimate(
                flops=2 * Cout * K * Mp + 2 * Cout * Mp, transcendentals=0,
                bytes_accessed=2 * K * Mp + 2 * Cout * K + 4 * Cout * Mp),
        )(w2d, patches, scale, shift)
    else:
        out3 = pl.pallas_call(
            bn_apply_kernel,
            out_shape=out_shape,
            grid=(N, hw_tiles),
            in_specs=[pl.BlockSpec((Cout, t_m), lambda n, j: (0, n * hw_tiles + j)),
                      sc_spec, sc_spec],
            out_specs=out_spec,
            compiler_params=compiler2,
            cost_estimate=pl.CostEstimate(
                flops=2 * Cout * Mp, transcendentals=0,
                bytes_accessed=2 * Cout * Mp + 4 * Cout * Mp),
        )(y_flat, scale, shift)

    if hw_pad != HW:
        out3 = out3[:, :, :HW]
    return out3.reshape(N, Cout, OH, OW)       # free reshape, no transpose


def reference_conv_bn(x, weight, gamma, beta, *, stride, padding, dilation,
                      compute_dtype=jnp.bfloat16):
    """Pure-JAX reference (conv + train-mode BN). Conv inputs cast to compute_dtype
    to match the bf16-fed MXU; BN math in f32."""
    y = lax.conv_general_dilated(
        x.astype(compute_dtype), weight.astype(compute_dtype),
        window_strides=(stride, stride),
        padding=[(padding, padding), (padding, padding)],
        rhs_dilation=(dilation, dilation),
        dimension_numbers=("NCHW", "OIHW", "NCHW"),
        preferred_element_type=jnp.float32)
    mean = jnp.mean(y, axis=(0, 2, 3), keepdims=True)
    var = jnp.mean((y - mean) ** 2, axis=(0, 2, 3), keepdims=True)
    return (y - mean) / jnp.sqrt(var + BN_EPS) * gamma.reshape(1, -1, 1, 1) \
        + beta.reshape(1, -1, 1, 1)


if __name__ == "__main__":
    key = jax.random.PRNGKey(0)
    kx, kw3, kw1 = jax.random.split(key, 3)
    x = jax.random.normal(kx, (2, 4, 16, 16), dtype=jnp.float32)
    # BatchNorm2d default init: weight (gamma) = 1, bias (beta) = 0.
    gamma = jnp.ones((8,), dtype=jnp.float32)
    beta = jnp.zeros((8,), dtype=jnp.float32)

    # Case 1: BasicConv2d(4, 8, kernel_size=3, stride=1, padding=1).
    # K=36 > 4*Cout -> stored-bf16-y path; block_m=128 -> 4 M-tiles, exercising the
    # parallel per-tile stats + wrapper reduction and the 2-D pass-2 grid.
    w3 = 0.1 * jax.random.normal(kw3, (8, 4, 3, 3), dtype=jnp.float32)
    out3 = basic_conv2d(x, w3, gamma, beta, stride=1, padding=1, dilation=1,
                        block_m=128)
    out3 = jax.block_until_ready(out3)
    ref3 = reference_conv_bn(x, w3, gamma, beta, stride=1, padding=1, dilation=1)
    assert out3.shape == (2, 8, 16, 16), out3.shape
    # Tolerance covers the (intentional) bf16 rounding of the stored y intermediate.
    assert jnp.allclose(out3, ref3, atol=3e-3, rtol=3e-3), \
        float(jnp.max(jnp.abs(out3 - ref3)))

    # Case 2: 1x1 conv -> recompute path (stats-only pass 1, fused matmul+BN pass 2,
    # no y intermediate in HBM).
    w1 = 0.1 * jax.random.normal(kw1, (8, 4, 1, 1), dtype=jnp.float32)
    out1 = basic_conv2d(x, w1, gamma, beta, stride=1, padding=0, dilation=1,
                        block_m=128)
    out1 = jax.block_until_ready(out1)
    ref1 = reference_conv_bn(x, w1, gamma, beta, stride=1, padding=0, dilation=1)
    assert out1.shape == (2, 8, 16, 16), out1.shape
    assert jnp.allclose(out1, ref1, atol=3e-3, rtol=3e-3), \
        float(jnp.max(jnp.abs(out1 - ref1)))

    print("KERNEL_OK")
</pallas_src>

<mosaic_0001>
module attributes {stable_mosaic.version = 11 : i64} {
  func.func @conv_stats_kernel(%arg0: i32, %arg1: memref<8x36xbf16, #tpu.memory_space<vmem>>, %arg2: memref<36x128xbf16, #tpu.memory_space<vmem>>, %arg3: memref<8x128xbf16, #tpu.memory_space<vmem>>, %arg4: memref<1x8x1xf32, #tpu.memory_space<vmem>>, %arg5: memref<1x8x1xf32, #tpu.memory_space<vmem>>) attributes {dimension_semantics = [#tpu.dimension_semantics<parallel>], iteration_bounds = array<i64: 4>, scalar_prefetch = 0 : i64, scratch_operands = 0 : i64, tpu.core_type = #tpu.core_type<tc>, window_params = [{pipeline_mode = #tpu.pipeline_mode<synchronous>, transform_indices = @transform_0, window_bounds = array<i64: 8, 36>}, {transform_indices = @transform_1, window_bounds = array<i64: 36, 128>}, {transform_indices = @transform_2, window_bounds = array<i64: 8, 128>}, {transform_indices = @transform_3, window_bounds = array<i64: 1, 8, 1>}, {transform_indices = @transform_4, window_bounds = array<i64: 1, 8, 1>}]} {
    %c0 = arith.constant 0 : index
    %c0_0 = arith.constant 0 : index
    %0 = vector.load %arg1[%c0, %c0_0] : memref<8x36xbf16, #tpu.memory_space<vmem>>, vector<8x36xbf16>
    %c0_1 = arith.constant 0 : index
    %c0_2 = arith.constant 0 : index
    %1 = vector.load %arg2[%c0_1, %c0_2] : memref<36x128xbf16, #tpu.memory_space<vmem>>, vector<36x128xbf16>
    %cst = arith.constant dense<0.000000e+00> : vector<8x128xf32>
    %2 = tpu.matmul %0, %1, %cst {dimension_numbers = #tpu.dot_dimension_numbers<[1], [0], [0], [1], [0, 0, 1, 1], [], []>} : vector<8x36xbf16>, vector<36x128xbf16>, vector<8x128xf32> -> vector<8x128xf32>
    %3 = arith.truncf %2 : vector<8x128xf32> to vector<8x128xbf16>
    %c0_3 = arith.constant 0 : index
    %c0_4 = arith.constant 0 : index
    %4 = vector.load %arg3[%c0_3, %c0_4] : memref<8x128xbf16, #tpu.memory_space<vmem>>, vector<8x128xbf16>
    tpu.vector_store %arg3[%c0_3, %c0_4], %3 {strides = array<i32>} : memref<8x128xbf16, #tpu.memory_space<vmem>>, vector<8x128xbf16>,
    %cst_5 = arith.constant dense<0.000000e+00> : vector<8xf32>
    %5 = vector.multi_reduction <add>, %2, %cst_5 [1] : vector<8x128xf32> to vector<8xf32>
    %6 = vector.shape_cast %5 : vector<8xf32> to vector<8x1xf32>
    %c0_6 = arith.constant 0 : index
    %c0_7 = arith.constant 0 : index
    %c0_8 = arith.constant 0 : index
    %7 = vector.load %arg4[%c0_6, %c0_7, %c0_8] : memref<1x8x1xf32, #tpu.memory_space<vmem>>, vector<1x8x1xf32>
    %8 = vector.shape_cast %7 : vector<1x8x1xf32> to vector<8x1xf32>
    %9 = vector.shape_cast %6 : vector<8x1xf32> to vector<1x8x1xf32>
    tpu.vector_store %arg4[%c0_6, %c0_7, %c0_8], %9 {strides = array<i32>} : memref<1x8x1xf32, #tpu.memory_space<vmem>>, vector<1x8x1xf32>,
    %10 = arith.mulf %2, %2 : vector<8x128xf32>
    %cst_9 = arith.constant dense<0.000000e+00> : vector<8xf32>
    %11 = vector.multi_reduction <add>, %10, %cst_9 [1] : vector<8x128xf32> to vector<8xf32>
    %12 = vector.shape_cast %11 : vector<8xf32> to vector<8x1xf32>
    %c0_10 = arith.constant 0 : index
    %c0_11 = arith.constant 0 : index
    %c0_12 = arith.constant 0 : index
    %13 = vector.load %arg5[%c0_10, %c0_11, %c0_12] : memref<1x8x1xf32, #tpu.memory_space<vmem>>, vector<1x8x1xf32>
    %14 = vector.shape_cast %13 : vector<1x8x1xf32> to vector<8x1xf32>
    %15 = vector.shape_cast %12 : vector<8x1xf32> to vector<1x8x1xf32>
    tpu.vector_store %arg5[%c0_10, %c0_11, %c0_12], %15 {strides = array<i32>} : memref<1x8x1xf32, #tpu.memory_space<vmem>>, vector<1x8x1xf32>,
    return
  }
  func.func @transform_0(%arg0: i32) -> (i32, i32) {
    %c0_i32 = arith.constant 0 : i32
    %c0_i32_0 = arith.constant 0 : i32
    %c0_i32_1 = arith.constant 0 : i32
    return %c0_i32, %c0_i32_0 : i32, i32
  }
  func.func @transform_1(%arg0: i32) -> (i32, i32) {
    %c0_i32 = arith.constant 0 : i32
    %c0_i32_0 = arith.constant 0 : i32
    return %c0_i32, %arg0 : i32, i32
  }
  func.func @transform_2(%arg0: i32) -> (i32, i32) {
    %c0_i32 = arith.constant 0 : i32
    %c0_i32_0 = arith.constant 0 : i32
    return %c0_i32, %arg0 : i32, i32
  }
  func.func @transform_3(%arg0: i32) -> (i32, i32, i32) {
    %c0_i32 = arith.constant 0 : i32
    %c0_i32_0 = arith.constant 0 : i32
    %c0_i32_1 = arith.constant 0 : i32
    return %arg0, %c0_i32, %c0_i32_0 : i32, i32, i32
  }
  func.func @transform_4(%arg0: i32) -> (i32, i32, i32) {
    %c0_i32 = arith.constant 0 : i32
    %c0_i32_0 = arith.constant 0 : i32
    %c0_i32_1 = arith.constant 0 : i32
    return %arg0, %c0_i32, %c0_i32_0 : i32, i32, i32
  }
}

</mosaic_0001>

<llo_original>
// kernel: tpu_custom_call.1
$region0: #{tpu_custom_call.1}
  #allocation0 [shape = 'u32[]', space=smem, size = 0x4, offset = 0x4, fixed_abs, tag = 'smem constant byte address 0x4 - core index']
  #allocation1 [shape = 'u32[144,128]{1,0:T(1,128)}', space=vmem, size = 0x12000, scoped, tag = 'internal scratch']
  %s0 = inlined_call_operand.hbm [shape: bf16[8,36], index: 0, kind: input, shape index: {}]
  %s1 = inlined_call_operand.hbm [shape: bf16[36,512], index: 1, kind: input, shape index: {}]
  %s2 = inlined_call_operand.hbm [shape: bf16[8,512], index: 2, kind: output, shape index: {0}]
  %s3 = inlined_call_operand.vmem [shape: f32[4,8,1], index: 3, kind: output, shape index: {1}]
  %s4 = inlined_call_operand.vmem [shape: f32[4,8,1], index: 4, kind: output, shape index: {2}]
  %5 = xla_tuple %s2, %s3, %s4
  %s6 = sld [smem:[#allocation0]]
  $region65: #{tpu_custom_call.1} parent=0
    _
  %s8 = ssub.s32 1, %s6
  %s9 = scalar_select 0, %s8, %s6
  $region1: #{tpu_custom_call.1} parent=0
    #allocation2 [shape = 'u8[2048]{0}', space=vmem, size = 0x800, scoped, tag = 'input window, operand 0, single buffered']
    #allocation3 [shape = 's32[2]{0}', space=sflag, size = 0x8, scoped, tag = 'scoped memory for tpu_custom_call.1']
    #allocation4 [shape = 's32[2]{0}', space=sflag, size = 0x8, scoped, tag = 'scoped memory for tpu_custom_call.1']
    #allocation5 [shape = 'u8[20480]{0}', space=vmem, size = 0x5000, scoped, tag = 'input window, operand 1']
    #allocation6 [shape = 's32[2]{0}', space=sflag, size = 0x8, scoped, tag = 'scoped memory for tpu_custom_call.1']
    #allocation7 [shape = 'u8[4096]{0}', space=vmem, size = 0x1000, scoped, tag = 'output window, operand 0']
    %10 = vsyncpa [#allocation3], 0
    %11 = vsyncpa [#allocation6], 0
    %s12 = scalar_lea.sflag [#allocation6], 1
    %13 = vsyncpa %s12, 0
    %14 = vsyncpa [#allocation4], 0
    %s15 = scalar_lea.sflag [#allocation4], 1
    %16 = vsyncpa %s15, 0
    loop: start=0, step=1, limit=6
    $region2: #{tpu_custom_call.1} parent=1 // loop_pre_header
      _
    $region3: #{tpu_custom_call.1} parent=1 // loop_header
      %s18 = sphi 0, %s22
      %p19 = scmp.ge.s32.totalorder %s18, 6
      %s26 = sphi 0, %s26
      %s28 = sphi 0, %s26
      %s29 = sphi 0, %s28
      %s43 = sphi 0, %s29
      %s49 = sphi 0, %s51
      %s52 = sphi 0, %s49
      %s53 = sphi 0, %s52
      %s69 = sphi 0, %s53
      %s75 = sphi 0, %s77
      %s78 = sphi 0, %s75
      %s79 = sphi 0, %s78
      %s95 = sphi 0, %s79
      %s101 = sphi 0, %s103
      %s104 = sphi 0, %s101
      %s105 = sphi 0, %s104
      %s121 = sphi 0, %s105
      %s127 = sphi 0, %s129
      %s130 = sphi 0, %s127
      %s131 = sphi 0, %s130
      %s147 = sphi 0, %s131
    $region4: #{tpu_custom_call.1} parent=1 // loop_header_branch
      %21 = sbr.rel (%p19) target = $region8
    $region5: #{tpu_custom_call.1} parent=1 // loop_body
      %s23 = ssub.s32 %s18, 1
      %s24 = ssub.s32 %s18, 2
      %s25 = sadd.s32 %s18, 1
      %s27 = sadd.s32 %s26, 1
      %p30 = scmp.eq.s32.totalorder %s18, 3
      %p31 = scmp.ne.s32.totalorder %s26, %s28
      %p32 = scmp.eq.s32.totalorder %s18, 0
      %p33 = por %p31, %p32
      %p34 = scmp.ne.s32.totalorder %s26, %s28
      %p35 = scmp.eq.s32.totalorder %s23, 3
      %p36 = por %p34, %p35
      %p37 = scmp.ne.s32.totalorder %s28, %s29
      %p38 = scmp.eq.s32.totalorder %s23, 0
      %p39 = por %p37, %p38
      %p40 = scmp.ne.s32.totalorder %s28, %s29
      %p41 = scmp.eq.s32.totalorder %s24, 3
      %p42 = por %p40, %p41
      %p44 = scmp.ne.s32.totalorder %s29, %s43
      %p45 = scmp.eq.s32.totalorder %s24, 0
      %p46 = por %p44, %p45
      %s47 = ssub.s32 %s18, %s25
      %p48 = scmp.eq.s32.totalorder %s47, 0
      %s50 = sadd.s32 %s49, 1
      %s51 = scalar_select %p48, %s49, %s50
      %p54 = pneg %p48
      %p55 = scmp.eq.s32.totalorder %s18, 3
      %p56 = por %p54, %p55
      %p57 = scmp.ne.s32.totalorder %s49, %s52
      %p58 = scmp.eq.s32.totalorder %s18, 0
      %p59 = por %p57, %p58
      %p60 = scmp.ne.s32.totalorder %s49, %s52
      %p61 = scmp.eq.s32.totalorder %s23, 3
      %p62 = por %p60, %p61
      %p63 = scmp.ne.s32.totalorder %s52, %s53
      %p64 = scmp.eq.s32.totalorder %s23, 0
      %p65 = por %p63, %p64
      %p66 = scmp.ne.s32.totalorder %s52, %s53
      %p67 = scmp.eq.s32.totalorder %s24, 3
      %p68 = por %p66, %p67
      %p70 = scmp.ne.s32.totalorder %s53, %s69
      %p71 = scmp.eq.s32.totalorder %s24, 0
      %p72 = por %p70, %p71
      %s73 = ssub.s32 %s18, %s25
      %p74 = scmp.eq.s32.totalorder %s73, 0
      %s76 = sadd.s32 %s75, 1
      %s77 = scalar_select %p74, %s75, %s76
      %p80 = pneg %p74
      %p81 = scmp.eq.s32.totalorder %s18, 3
      %p82 = por %p80, %p81
      %p83 = scmp.ne.s32.totalorder %s75, %s78
      %p84 = scmp.eq.s32.totalorder %s18, 0
      %p85 = por %p83, %p84
      %p86 = scmp.ne.s32.totalorder %s75, %s78
      %p87 = scmp.eq.s32.totalorder %s23, 3
      %p88 = por %p86, %p87
      %p89 = scmp.ne.s32.totalorder %s78, %s79
      %p90 = scmp.eq.s32.totalorder %s23, 0
      %p91 = por %p89, %p90
      %p92 = scmp.ne.s32.totalorder %s78, %s79
      %p93 = scmp.eq.s32.totalorder %s24, 3
      %p94 = por %p92, %p93
      %p96 = scmp.ne.s32.totalorder %s79, %s95
      %p97 = scmp.eq.s32.totalorder %s24, 0
      %p98 = por %p96, %p97
      %s99 = ssub.s32 %s18, %s25
      %p100 = scmp.eq.s32.totalorder %s99, 0
      %s102 = sadd.s32 %s101, 1
      %s103 = scalar_select %p100, %s101, %s102
      %p106 = pneg %p100
      %p107 = scmp.eq.s32.totalorder %s18, 3
      %p108 = por %p106, %p107
      %p109 = scmp.ne.s32.totalorder %s101, %s104
      %p110 = scmp.eq.s32.totalorder %s18, 0
      %p111 = por %p109, %p110
      %p112 = scmp.ne.s32.totalorder %s101, %s104
      %p113 = scmp.eq.s32.totalorder %s23, 3
      %p114 = por %p112, %p113
      %p115 = scmp.ne.s32.totalorder %s104, %s105
      %p116 = scmp.eq.s32.totalorder %s23, 0
      %p117 = por %p115, %p116
      %p118 = scmp.ne.s32.totalorder %s104, %s105
      %p119 = scmp.eq.s32.totalorder %s24, 3
      %p120 = por %p118, %p119
      %p122 = scmp.ne.s32.totalorder %s105, %s121
      %p123 = scmp.eq.s32.totalorder %s24, 0
      %p124 = por %p122, %p123
      %s125 = ssub.s32 %s18, %s25
      %p126 = scmp.eq.s32.totalorder %s125, 0
      %s128 = sadd.s32 %s127, 1
      %s129 = scalar_select %p126, %s127, %s128
      %p132 = pneg %p126
      %p133 = scmp.eq.s32.totalorder %s18, 3
      %p134 = por %p132, %p133
      %p135 = scmp.ne.s32.totalorder %s127, %s130
      %p136 = scmp.eq.s32.totalorder %s18, 0
      %p137 = por %p135, %p136
      %p138 = scmp.ne.s32.totalorder %s127, %s130
      %p139 = scmp.eq.s32.totalorder %s23, 3
      %p140 = por %p138, %p139
      %p141 = scmp.ne.s32.totalorder %s130, %s131
      %p142 = scmp.eq.s32.totalorder %s23, 0
      %p143 = por %p141, %p142
      %p144 = scmp.ne.s32.totalorder %s130, %s131
      %p145 = scmp.eq.s32.totalorder %s24, 3
      %p146 = por %p144, %p145
      %p148 = scmp.ne.s32.totalorder %s131, %s147
      %p149 = scmp.eq.s32.totalorder %s24, 0
      %p150 = por %p148, %p149
      %p151 = scmp.le.s32.totalorder 1, %s18
      %p152 = scmp.lt.s32.totalorder %s18, 5
      %p153 = pnand %p151, %p152
      %p154 = pneg %p153
      // Predicated region
      $region9: #{tpu_custom_call.1} parent=5 // pred_check
        _
      $region10: #{tpu_custom_call.1} parent=5 // pred_check_branch
        %156 = sbr.rel (%p153) target = $region12
      $region11: #{tpu_custom_call.1} parent=5 // pred_region
        %s157 = ssub.s32 %s18, 1
        // Predicated region
        $region13: #{tpu_custom_call.1} parent=11 // pred_check
          %p158 = pneg %p39
        $region14: #{tpu_custom_call.1} parent=11 // pred_check_branch
          %160 = sbr.rel (%p158) target = $region16
        $region15: #{tpu_custom_call.1} parent=11 // pred_region
          %s162 = ssub.s32 64, 64
          %163 = vsyncadd [#allocation3], %s162
          %s165 = sshll.u32 [#allocation2], 4
          %s166 = int_to_ptr.vmem [resolvable:$true] %s165
          %168 = dma.hbm_to_vmem [thread:$0]  %s0, 64, %s166, [#allocation3]
        $region16: #{tpu_custom_call.1} parent=11 // pred_fallthru
          _
      $region12: #{tpu_custom_call.1} parent=5 // pred_fallthru
        _
      %p169 = scmp.lt.s32.totalorder %s18, 4
      // Predicated region
      $region17: #{tpu_custom_call.1} parent=5 // pred_check
        %p170 = pneg %p169
      $region18: #{tpu_custom_call.1} parent=5 // pred_check_branch
        %172 = sbr.rel (%p170) target = $region20
      $region19: #{tpu_custom_call.1} parent=5 // pred_region
        // Predicated region
        $region21: #{tpu_custom_call.1} parent=19 // pred_check
          %p173 = pneg %p59
        $region22: #{tpu_custom_call.1} parent=19 // pred_check_branch
          %175 = sbr.rel (%p173) target = $region24
        $region23: #{tpu_custom_call.1} parent=19 // pred_region
          %s176 = sand.u32 %s49, 1
          %s177 = scalar_lea.sflag [#allocation6], %s176
          %s178 = sand.u32 %s49, 1
          %s179 = smul.addr %s178, 20
          %s180 = scalar_lea.vmem [#allocation5], %s179
          %s182 = ssub.s32 320, 320
          %183 = vsyncadd %s177, %s182
          %s184 = smul.addr %s18, 64
          %s185 = scalar_lea.hbm %s1, %s184
          %s186 = sshll.u32 %s180, 4
          %s187 = int_to_ptr.vmem [resolvable:$true] %s186
          %192 = dma.hbm_to_vmem [thread:$0]  %s185, 320, %s187, %s177, 256, 64, 4
        $region24: #{tpu_custom_call.1} parent=19 // pred_fallthru
          _
      $region20: #{tpu_custom_call.1} parent=5 // pred_fallthru
        _
      %p193 = scmp.le.s32.totalorder 1, %s18
      %p194 = scmp.lt.s32.totalorder %s18, 5
      %p195 = pnand %p193, %p194
      %p196 = pneg %p195
      // Predicated region
      $region25: #{tpu_custom_call.1} parent=5 // pred_check
        _
      $region26: #{tpu_custom_call.1} parent=5 // pred_check_branch
        %198 = sbr.rel (%p195) target = $region28
      $region27: #{tpu_custom_call.1} parent=5 // pred_region
        %s199 = ssub.s32 %s18, 1
        // Predicated region
        $region29: #{tpu_custom_call.1} parent=27 // pred_check
          %p200 = pneg %p39
        $region30: #{tpu_custom_call.1} parent=27 // pred_check_branch
          %202 = sbr.rel (%p200) target = $region32
        $region31: #{tpu_custom_call.1} parent=27 // pred_region
          %203 = dma.done [#allocation3], 64
        $region32: #{tpu_custom_call.1} parent=27 // pred_fallthru
          _
        %s204 = sand.u32 %s52, 1
        %s205 = scalar_lea.sflag [#allocation6], %s204
        %s206 = sand.u32 %s52, 1
        %s207 = smul.addr %s206, 20
        %s208 = scalar_lea.vmem [#allocation5], %s207
        // Predicated region
        $region33: #{tpu_custom_call.1} parent=27 // pred_check
          %p209 = pneg %p65
        $region34: #{tpu_custom_call.1} parent=27 // pred_check_branch
          %211 = sbr.rel (%p209) target = $region36
        $region35: #{tpu_custom_call.1} parent=27 // pred_region
          %212 = dma.done %s205, 320
        $region36: #{tpu_custom_call.1} parent=27 // pred_fallthru
          _
        %p213 = pneg %p39
        %p214 = pneg %p36
        %s215 = sand.u32 %s52, 1
        %s216 = scalar_lea.sflag [#allocation6], %s215
        %s217 = sand.u32 %s52, 1
        %s218 = smul.addr %s217, 20
        %s219 = scalar_lea.vmem [#allocation5], %s218
        %p220 = pneg %p65
        %p221 = pneg %p62
        %p222 = pneg %p91
        %p223 = pneg %p88
        %s224 = sand.u32 %s78, 1
        %s225 = scalar_lea.sflag [#allocation4], %s224
        %s226 = sand.u32 %s78, 1
        %s227 = smul.addr %s226, 4
        %s228 = scalar_lea.vmem [#allocation7], %s227
        %p229 = pneg %p117
        %p230 = pneg %p114
        %p231 = scmp.lt.s32.totalorder %s23, 3
        %s232 = scalar_select %p231, %s23, 3
        %s233 = smul.addr %s232, 8
        %s234 = scalar_lea.vmem %s3, %s233
        %p235 = pneg %p143
        %p236 = pneg %p140
        %p237 = scmp.lt.s32.totalorder %s23, 3
        %s238 = scalar_select %p237, %s23, 3
        %s239 = smul.addr %s238, 8
        %s240 = scalar_lea.vmem %s4, %s239
        %p241 = scmp.lt.s32.totalorder %s23, 3
        %s242 = scalar_select %p241, %s23, 3
        %s243 = smul.addr %s242, 8
        %s244 = scalar_lea.vmem %s3, %s243
        %p245 = scmp.lt.s32.totalorder %s23, 3
        %s246 = scalar_select %p245, %s23, 3
        %s247 = smul.addr %s246, 8
        %s248 = scalar_lea.vmem %s4, %s247
        %v250 = vld [vmem:[#allocation2] sm:$0xf]
        %v251 = vld [vmem:[%s208] sm:$0xf]
        %v252 = vld [vmem:[%s208 + $0x4] sm:$0xf]
        %v253 = vld [vmem:[%s208 + $0x8] sm:$0xf]
        %v254 = vld [vmem:[%s208 + $0xc] sm:$0xf]
        %v255 = vld [vmem:[%s208 + $0x10] sm:$0x3]
        %v261 = vunpack.c.l.b16 %v251
        %v262 = vunpack.c.l.b16 %v252
        %v263 = vunpack.c.l.b16 %v253
        %v264 = vunpack.c.l.b16 %v254
        %v265 = vunpack.c.l.b16 %v255
        %v266 = vpack.c.b16 %v262, %v261
        %v267 = vpack.c.b16 %v264, %v263
        %v268 = vpack.c.b16 %v265, %v265
        %vm271 = vcmask 293888
        %v273 = vsel %vm271, %v250, 0
        %vm275 = vcmask 1041408
        %v277 = vsel %vm275, %v268, 0
        %279 = vmatprep.subr.bf16.mxu0 0
        %280 = vmatpush1.bf16.msra.mxu0 0
        %281 = vmatprep.subr.bf16.mxu0 0
        %282 = vmatpush1.bf16.msra.mxu0 0
        %283 = vmatprep.subr.bf16.mxu0 0
        %284 = vmatpush1.bf16.msra.mxu0 0
        %285 = vmatprep.subr.bf16.mxu0 0
        %286 = vmatpush1.bf16.msra.mxu0 0
        %287 = vmatprep.subr.bf16.mxu0 0
        %288 = vmatpush1.bf16.msra.mxu0 0
        %289 = vmatprep.subr.bf16.mxu0 0
        %290 = vmatpush1.bf16.msra.mxu0 %v277
        %291 = vmatprep.subr.bf16.mxu0 0
        %292 = vmatpush1.bf16.msra.mxu0 %v267
        %293 = vmatprep.subr.bf16.mxu0 0
        %294 = vmatpush1.bf16.msra.mxu0 %v266
        %295 = vmatprep.subr.bf16.mxu0 0
        %296 = vmatpush2.bf16.msra.mxu0 0
        %297 = vmatprep.subr.bf16.mxu0 0
        %298 = vmatpush2.bf16.msra.mxu0 0
        %299 = vmatprep.subr.bf16.mxu0 0
        %300 = vmatpush2.bf16.msra.mxu0 0
        %301 = vmatprep.subr.bf16.mxu0 0
        %302 = vmatpush2.bf16.msra.mxu0 0
        %303 = vmatprep.subr.bf16.mxu0 0
        %304 = vmatpush2.bf16.msra.mxu0 0
        %305 = vmatprep.subr.bf16.mxu0 0
        %306 = vmatpush2.bf16.msra.mxu0 0
        %307 = vmatprep.subr.bf16.mxu0 0
        %308 = vmatpush2.bf16.msra.mxu0 0
        %309 = vmatprep.subr.bf16.mxu0 0
        %310 = vmatpush2.bf16.msra.mxu0 0
        %311 = vmatprep.mubr.bf16.mxu0 0
        %312 = vmatmul.mubr.bf16.gmra.mxu0 %v273
        %v313 = vpop.f32.mrf.mxu0
        %v314 = vadd.f32 0.0, %v313
        %v315 = vpop.f32.mrf.mxu0
        %v316 = vpop.f32.mrf.mxu0
        %v317 = vpop.f32.mrf.mxu0
        %318 = vdwg.mxu0
        %v319 = vpack.c.bf16 %v314, %v314
        %320 = vst [vmem:[%s228] sm:$0xf] %v319
        %321 = vadd.xlane.f32.xlu0 %v314
        %v322 = vpop.xlane.xlu0 %321
        %vm323 = vcmask 7168
        %324 = vst.msk [vmem:[%s244] sm:$0xff] %vm323, %v322
        %v325 = vmul.f32 %v314, %v314
        %326 = vadd.xlane.f32.xlu0 %v325
        %v327 = vpop.xlane.xlu0 %326
        %328 = vst.msk [vmem:[%s248] sm:$0xff] %vm323, %v327
        %s329 = sand.u32 %s78, 1
        %s330 = scalar_lea.sflag [#allocation4], %s329
        %s331 = sand.u32 %s78, 1
        %s332 = smul.addr %s331, 4
        %s333 = scalar_lea.vmem [#allocation7], %s332
        %p334 = scmp.lt.s32.totalorder %s23, 3
        %s335 = scalar_select %p334, %s23, 3
        %s336 = smul.addr %s335, 8
        %s337 = scalar_lea.vmem %s3, %s336
        %p338 = scmp.lt.s32.totalorder %s23, 3
        %s339 = scalar_select %p338, %s23, 3
        %s340 = smul.addr %s339, 8
        %s341 = scalar_lea.vmem %s4, %s340
        // Predicated region
        $region37: #{tpu_custom_call.1} parent=27 // pred_check
          %p342 = pneg %p88
        $region38: #{tpu_custom_call.1} parent=27 // pred_check_branch
          %344 = sbr.rel (%p342) target = $region40
        $region39: #{tpu_custom_call.1} parent=27 // pred_region
          %s346 = ssub.s32 64, 64
          %347 = vsyncadd %s330, %s346
          %s348 = smul.addr %s23, 64
          %s349 = scalar_lea.hbm %s2, %s348
          %s351 = sshll.u32 %s333, 4
          %s352 = int_to_ptr.vmem [resolvable:$true] %s351
          %354 = dma.vmem_to_hbm [thread:$0]  %s352, 64, %s349, %s330
        $region40: #{tpu_custom_call.1} parent=27 // pred_fallthru
          _
        // Predicated region
        $region41: #{tpu_custom_call.1} parent=27 // pred_check
          %p355 = pneg %p114
        $region42: #{tpu_custom_call.1} parent=27 // pred_check_branch
          %357 = sbr.rel (%p355) target = $region44
        $region43: #{tpu_custom_call.1} parent=27 // pred_region
          _
        $region44: #{tpu_custom_call.1} parent=27 // pred_fallthru
          _
        // Predicated region
        $region45: #{tpu_custom_call.1} parent=27 // pred_check
          %p358 = pneg %p140
        $region46: #{tpu_custom_call.1} parent=27 // pred_check_branch
          %360 = sbr.rel (%p358) target = $region48
        $region47: #{tpu_custom_call.1} parent=27 // pred_region
          _
        $region48: #{tpu_custom_call.1} parent=27 // pred_fallthru
          _
      $region28: #{tpu_custom_call.1} parent=5 // pred_fallthru
        _
      %p361 = scmp.le.s32.totalorder 2, %s18
      // Predicated region
      $region49: #{tpu_custom_call.1} parent=5 // pred_check
        %p362 = pneg %p361
      $region50: #{tpu_custom_call.1} parent=5 // pred_check_branch
        %364 = sbr.rel (%p362) target = $region52
      $region51: #{tpu_custom_call.1} parent=5 // pred_region
        %s365 = ssub.s32 %s18, 2
        // Predicated region
        $region53: #{tpu_custom_call.1} parent=51 // pred_check
          %p366 = pneg %p94
        $region54: #{tpu_custom_call.1} parent=51 // pred_check_branch
          %368 = sbr.rel (%p366) target = $region56
        $region55: #{tpu_custom_call.1} parent=51 // pred_region
          %s369 = sand.u32 %s79, 1
          %s370 = scalar_lea.sflag [#allocation4], %s369
          %s371 = sand.u32 %s79, 1
          %s372 = smul.addr %s371, 4
          %s373 = scalar_lea.vmem [#allocation7], %s372
          %374 = dma.done %s370, 64
        $region56: #{tpu_custom_call.1} parent=51 // pred_fallthru
          _
        // Predicated region
        $region57: #{tpu_custom_call.1} parent=51 // pred_check
          %p375 = pneg %p120
        $region58: #{tpu_custom_call.1} parent=51 // pred_check_branch
          %377 = sbr.rel (%p375) target = $region60
        $region59: #{tpu_custom_call.1} parent=51 // pred_region
          %p378 = scmp.lt.s32.totalorder %s24, 3
          %s379 = scalar_select %p378, %s24, 3
          %s380 = smul.addr %s379, 8
          %s381 = scalar_lea.vmem %s3, %s380
        $region60: #{tpu_custom_call.1} parent=51 // pred_fallthru
          _
        // Predicated region
        $region61: #{tpu_custom_call.1} parent=51 // pred_check
          %p382 = pneg %p146
        $region62: #{tpu_custom_call.1} parent=51 // pred_check_branch
          %384 = sbr.rel (%p382) target = $region64
        $region63: #{tpu_custom_call.1} parent=51 // pred_region
          %p385 = scmp.lt.s32.totalorder %s24, 3
          %s386 = scalar_select %p385, %s24, 3
          %s387 = smul.addr %s386, 8
          %s388 = scalar_lea.vmem %s4, %s387
        $region64: #{tpu_custom_call.1} parent=51 // pred_fallthru
          _
      $region52: #{tpu_custom_call.1} parent=5 // pred_fallthru
        _
    $region6: #{tpu_custom_call.1} parent=1 // loop_footer
      %s22 = sadd.s32 1, %s18
    $region7: #{tpu_custom_call.1} parent=1 // loop_footer_branch
      %17 = sbr.rel target = $region3
    $region8: #{tpu_custom_call.1} parent=1 // loop_exit
      _
    %389 = vsyncpa [#allocation3], 1
    %s390 = scalar_lea.sflag [#allocation3], 1
    %391 = vsyncpa %s390, 1
    %392 = vsyncpa [#allocation6], 1
    %s393 = scalar_lea.sflag [#allocation6], 1
    %394 = vsyncpa %s393, 1
    %395 = vsyncpa [#allocation4], 1
    %s396 = scalar_lea.sflag [#allocation4], 1
    %397 = vsyncpa %s396, 1

</llo_original>
